<compile_context>
chip_gen: v5e
topology: v5e:2x2
jax: 0.10.0
libtpu: 0.0.40
codegen_flags: <defaults>
</compile_context>

<pallas_src>
import functools

import jax
import jax.numpy as jnp
from jax.experimental import pallas as pl
from jax.experimental.pallas import tpu as pltpu

# Module hyper-parameters (synthetic, deterministic init below).
MULT_CLASS_NUM = 9
NH_CLASS_NUM = 7
C_W_EMBED_DIM = 8
MULT_EMBED_DIM = 32
NH_EMBED_DIM = 16
NODE_FEATURE_DIM = MULT_EMBED_DIM + NH_EMBED_DIM + 2 * C_W_EMBED_DIM  # 64

# Fused-table layout, per node ("half" of a packed output row):
#   rows 0..6   : nH_table   @ W[16:32]   (feature lane = one-hot(nH))
#   rows 7..15  : mult_table @ W[32:64]   (feature lane = one-hot(multiplet)+7)
#   row  16     : cen_w2 @ W[0:8]         (feature lane = SiLU(cen*w1+b1))
#   row  17     : wid_w2 @ W[8:16]        (feature lane = SiLU(wid*w1+b1))
#   rows 18..23 : zeros (pad K to a multiple of 8; bias is added post-matmul)
CONT_OFF = NH_CLASS_NUM + MULT_CLASS_NUM      # 16
HALF_K = 24                                   # padded per-node feature width
OUT_LANES = 2 * NODE_FEATURE_DIM              # 128: two nodes per output row


def _cdiv(a, b):
    return -(-a // b)


def _round_up(a, b):
    return _cdiv(a, b) * b


def _num_tensorcores():
    """v7x has 2 TensorCores per chip, v5e/v6e have 1 (heuristic on device_kind)."""
    try:
        kind = jax.devices()[0].device_kind.lower()
    except Exception:
        return 1
    return 2 if "7" in kind else 1


def _silu(x):
    return x * jax.nn.sigmoid(x)


def node_embed_kernel(packed_ref, table_ref, aux_ref, out_ref, feat_ref):
    t2 = out_ref.shape[0]                      # pair-rows in this tile

    pf = packed_ref[...]                                   # [t2, 8] f32
    # Columns 4..7 carry the (pre-offset) nH/multiplet indices as raw int32 bits.
    idx = pltpu.bitcast(pf[:, 4:8], jnp.int32)             # [t2, 4] int32

    # One-hot part of the fused feature matrix -> VMEM feat scratch.
    # Indices were pre-offset in the wrapper so the four class positions land in
    # disjoint lane ranges (0..6, 7..15, 24..30, 31..39); lanes 16..23 / 40..47
    # come out zero and are (partially) overwritten below.
    lane = jax.lax.broadcasted_iota(jnp.int32, (t2, 2 * HALF_K), 1)
    onehot = ((lane == idx[:, 0:1]) | (lane == idx[:, 1:2])
              | (lane == idx[:, 2:3]) | (lane == idx[:, 3:4])
              ).astype(jnp.float32)
    feat_ref[...] = onehot

    # Continuous part: SiLU(x*w1 + b1) for [cen_e, wid_e, cen_o, wid_o] in one
    # [t2,4] pass.  w1/b1 quadruples are precomputed rows of the aux array.
    w1 = aux_ref[1:2, 0:4]                                 # [1, 4]
    b1 = aux_ref[2:3, 0:4]                                 # [1, 4]
    a = pf[:, 0:4] * w1 + b1
    h = a * pl.reciprocal(1.0 + jnp.exp(-a), approx=False)  # exp -> EUP
    # Narrow column stores onto the (otherwise idle) store slot, not VALU selects.
    feat_ref[:, CONT_OFF:CONT_OFF + 2] = h[:, 0:2]
    feat_ref[:, HALF_K + CONT_OFF:HALF_K + CONT_OFF + 2] = h[:, 2:4]

    # One small-K MXU matmul does both embedding gathers, both 1->8 projections
    # and the 64x64 projection for two nodes at once -> [t2, 128].
    acc = jnp.dot(feat_ref[...], table_ref[...], preferred_element_type=jnp.float32)
    acc = acc + aux_ref[0:1, :]                            # fused bias, [1, 128]

    # Output SiLU; exact reciprocal keeps numerics within ~1e-6 of the reference.
    # TODO(synk): use approx=True (EUP vrcp) if downstream tolerates ~2e-4 rel err.
    out_ref[...] = (acc * pl.reciprocal(1.0 + jnp.exp(-acc), approx=False)
                    ).astype(out_ref.dtype)


def _fuse_params(p):
    """Fold the 1->8 MLP outputs, both embedding tables and the 64x64 projection
    into one block-diagonal [48, 128] table, plus an [8, 128] aux array holding
    the fused bias row and the Linear(1,1) weight/bias quadruples."""
    W = p["proj_w"]                                                  # [in, out]
    cen_fused = p["cen_w2"] @ W[0:C_W_EMBED_DIM, :]                  # [1, 64]
    wid_fused = p["wid_w2"] @ W[C_W_EMBED_DIM:2 * C_W_EMBED_DIM, :]  # [1, 64]
    nh_fused = p["nH_table"] @ W[2 * C_W_EMBED_DIM:
                                 2 * C_W_EMBED_DIM + NH_EMBED_DIM, :]     # [7, 64]
    mult_fused = p["mult_table"] @ W[2 * C_W_EMBED_DIM + NH_EMBED_DIM:, :]  # [9,64]
    b_fused = (p["cen_b2"] @ W[0:C_W_EMBED_DIM, :]
               + p["wid_b2"] @ W[C_W_EMBED_DIM:2 * C_W_EMBED_DIM, :]
               + p["proj_b"])                                        # [1, 64]

    half = jnp.zeros((HALF_K, NODE_FEATURE_DIM), jnp.float32)
    half = half.at[0:NH_CLASS_NUM].set(nh_fused)
    half = half.at[NH_CLASS_NUM:CONT_OFF].set(mult_fused)
    half = half.at[CONT_OFF].set(cen_fused[0])
    half = half.at[CONT_OFF + 1].set(wid_fused[0])

    # Block-diagonal so two nodes share one lane-dense [t2, 128] matmul.
    table = jnp.zeros((2 * HALF_K, OUT_LANES), jnp.float32)
    table = table.at[0:HALF_K, 0:NODE_FEATURE_DIM].set(half)
    table = table.at[HALF_K:, NODE_FEATURE_DIM:].set(half)

    aux = jnp.zeros((8, OUT_LANES), jnp.float32)
    aux = aux.at[0, 0:NODE_FEATURE_DIM].set(b_fused[0])
    aux = aux.at[0, NODE_FEATURE_DIM:].set(b_fused[0])
    w1 = jnp.stack([p["cen_w1"][0, 0], p["wid_w1"][0, 0],
                    p["cen_w1"][0, 0], p["wid_w1"][0, 0]])
    b1 = jnp.stack([p["cen_b1"][0, 0], p["wid_b1"][0, 0],
                    p["cen_b1"][0, 0], p["wid_b1"][0, 0]])
    aux = aux.at[1, 0:4].set(w1)
    aux = aux.at[2, 0:4].set(b1)
    return table, aux


def init_params(key):
    ks = jax.random.split(key, 12)
    s = lambda k, shape: (jax.random.normal(k, shape, jnp.float32) * 0.1)
    return {
        "cen_w1": s(ks[0], (1, 1)), "cen_b1": s(ks[1], (1, 1)),
        "cen_w2": s(ks[2], (1, C_W_EMBED_DIM)), "cen_b2": s(ks[3], (1, C_W_EMBED_DIM)),
        "wid_w1": s(ks[4], (1, 1)), "wid_b1": s(ks[5], (1, 1)),
        "wid_w2": s(ks[6], (1, C_W_EMBED_DIM)), "wid_b2": s(ks[7], (1, C_W_EMBED_DIM)),
        "nH_table": s(ks[8], (NH_CLASS_NUM, NH_EMBED_DIM)),
        "mult_table": s(ks[9], (MULT_CLASS_NUM, MULT_EMBED_DIM)),
        "proj_w": s(ks[10], (NODE_FEATURE_DIM, NODE_FEATURE_DIM)),  # [in, out]
        "proj_b": s(ks[11], (1, NODE_FEATURE_DIM)),
    }


@functools.partial(jax.jit, static_argnames=("tile_n", "out_dtype"))
def node_feature_embedding(centroid, width, nH, multiplet, params,
                           tile_n=8192, out_dtype=jnp.float32):
    n = centroid.shape[0]
    rows = (n + 1) // 2          # two nodes per packed (128-lane) output row
    n2 = 2 * rows

    # --- grid sizing: big tiles, exact output (no trailing tile padding) -----
    tile2_cap = max(8, (max(tile_n, 16) // 2 // 8) * 8)   # pair-rows per tile, cap
    num_steps = _cdiv(rows, tile2_cap)
    ncores = _num_tensorcores()
    if ncores > 1 and rows >= 1024:
        # Give both v7x TensorCores an equal number of grid steps; no forced
        # split on single-TC v5e/v6e (it would only add per-step overhead).
        num_steps = _round_up(max(num_steps, ncores), ncores)
    tile2 = _round_up(_cdiv(rows, num_steps), 8)
    num_steps = _cdiv(rows, tile2)

    # --- pack the four per-node streams into ONE (rows, 8) f32 array ---------
    #   cols 0..3: [cen_even, wid_even, cen_odd, wid_odd]           (float32)
    #   cols 4..7: [nh_e, mu_e+7, nh_o+24, mu_o+31]   (int32 bits, pre-offset)
    def flat(x, dt):
        x = x.reshape(-1).astype(dt)
        return jnp.pad(x, (0, n2 - n)).reshape(rows, 2)

    cen = flat(centroid, jnp.float32)
    wid = flat(width, jnp.float32)
    nh = flat(nH, jnp.int32)
    mu = flat(multiplet, jnp.int32)

    idx = jnp.concatenate(
        [nh[:, 0:1],
         mu[:, 0:1] + NH_CLASS_NUM,
         nh[:, 1:2] + HALF_K,
         mu[:, 1:2] + NH_CLASS_NUM + HALF_K], axis=1)                 # (rows, 4)
    cont = jnp.stack([cen[:, 0], wid[:, 0], cen[:, 1], wid[:, 1]], axis=1)
    packed = jnp.concatenate(
        [cont, jax.lax.bitcast_convert_type(idx, jnp.float32)], axis=1)  # (rows, 8)

    table, aux = _fuse_params(params)

    cost = pl.CostEstimate(
        flops=2 * rows * (2 * HALF_K) * OUT_LANES,
        transcendentals=rows * (OUT_LANES + 4),
        bytes_accessed=(rows * 8 * 4                        # packed input
                        + rows * OUT_LANES * jnp.dtype(out_dtype).itemsize
                        + (2 * HALF_K + 8) * OUT_LANES * 4),  # table + aux
    )

    out = pl.pallas_call(
        node_embed_kernel,
        out_shape=jax.ShapeDtypeStruct((rows, OUT_LANES), out_dtype),
        grid=(num_steps,),
        in_specs=[
            pl.BlockSpec((tile2, 8), lambda i: (i, 0)),               # packed nodes
            # Constant block index: the pipeline keeps these resident and does
            # not re-issue their DMA on later grid steps.
            pl.BlockSpec((2 * HALF_K, OUT_LANES), lambda i: (0, 0)),  # fused table
            pl.BlockSpec((8, OUT_LANES), lambda i: (0, 0)),           # bias + w1/b1
        ],
        out_specs=pl.BlockSpec((tile2, OUT_LANES), lambda i: (i, 0)),
        scratch_shapes=[pltpu.VMEM((tile2, 2 * HALF_K), jnp.float32)],  # feat
        compiler_params=pltpu.CompilerParams(
            dimension_semantics=("parallel",),
            vmem_limit_bytes=32 * 1024 * 1024,   # per-step usage is only ~3 MiB
        ),
        cost_estimate=cost,
    )(packed, table, aux)

    # (rows, 128) row-major is bytewise identical to (2*rows, 64): free reshape.
    out = out.reshape(n2, NODE_FEATURE_DIM)
    if n2 != n:
        # TODO(synk): pad N to an even count upstream to avoid this slice copy.
        out = out[:n]
    return out


def reference_forward(centroid, width, nH, multiplet, p):
    cen = centroid.reshape(-1, 1).astype(jnp.float32)
    wid = width.reshape(-1, 1).astype(jnp.float32)
    cen_vec = _silu(cen * p["cen_w1"] + p["cen_b1"]) * p["cen_w2"] + p["cen_b2"]
    wid_vec = _silu(wid * p["wid_w1"] + p["wid_b1"]) * p["wid_w2"] + p["wid_b2"]
    nh_vec = p["nH_table"][nH]
    mult_vec = p["mult_table"][multiplet]
    x = jnp.concatenate([cen_vec, wid_vec, nh_vec, mult_vec], axis=-1)
    return _silu(x @ p["proj_w"] + p["proj_b"])


if __name__ == "__main__":
    key = jax.random.PRNGKey(0)
    k_data, k_p = jax.random.split(key, 2)
    params = init_params(k_p)

    # (N=37, default big tile: single step, odd N exercises the partial pair-row)
    # (N=500, tile_n=128: multi-step grid exercises the pipelined path, even N)
    for n_nodes, tile in ((37, 8192), (500, 128)):
        kc, kw, knh, km = jax.random.split(jax.random.fold_in(k_data, n_nodes), 4)
        centroid = jax.random.normal(kc, (n_nodes,), jnp.float32)
        width = jax.random.uniform(kw, (n_nodes,), jnp.float32)
        nH = jax.random.randint(knh, (n_nodes,), 0, NH_CLASS_NUM, jnp.int32)
        multiplet = jax.random.randint(km, (n_nodes,), 0, MULT_CLASS_NUM, jnp.int32)

        out = node_feature_embedding(centroid, width, nH, multiplet, params,
                                     tile_n=tile)
        out = jax.block_until_ready(out)

        ref = reference_forward(centroid, width, nH, multiplet, params)
        assert out.shape == (n_nodes, NODE_FEATURE_DIM), out.shape
        err = float(jnp.max(jnp.abs(out - ref)))
        assert jnp.allclose(out, ref, atol=2e-5, rtol=2e-5), err

    print("KERNEL_OK")
</pallas_src>

<mosaic_0001>
module attributes {stable_mosaic.version = 11 : i64} {
  func.func @node_embed_kernel(%arg0: i32, %arg1: memref<24x8xf32, #tpu.memory_space<vmem>>, %arg2: memref<48x128xf32, #tpu.memory_space<vmem>>, %arg3: memref<8x128xf32, #tpu.memory_space<vmem>>, %arg4: memref<24x128xf32, #tpu.memory_space<vmem>>, %arg5: memref<24x48xf32, #tpu.memory_space<vmem>>) attributes {dimension_semantics = [#tpu.dimension_semantics<parallel>], iteration_bounds = array<i64: 1>, scalar_prefetch = 0 : i64, scratch_operands = 1 : i64, tpu.core_type = #tpu.core_type<tc>, window_params = [{transform_indices = @transform_0, window_bounds = array<i64: 24, 8>}, {pipeline_mode = #tpu.pipeline_mode<synchronous>, transform_indices = @transform_1, window_bounds = array<i64: 48, 128>}, {pipeline_mode = #tpu.pipeline_mode<synchronous>, transform_indices = @transform_2, window_bounds = array<i64: 8, 128>}, {transform_indices = @transform_3, window_bounds = array<i64: 24, 128>}]} {
    %c0 = arith.constant 0 : index
    %c0_0 = arith.constant 0 : index
    %0 = vector.load %arg1[%c0, %c0_0] : memref<24x8xf32, #tpu.memory_space<vmem>>, vector<24x8xf32>
    %1 = vector.extract_strided_slice %0 {offsets = [0, 4], sizes = [24, 4], strides = [1, 1]} : vector<24x8xf32> to vector<24x4xf32>
    %2 = tpu.bitcast %1 : vector<24x4xf32> -> vector<24x4xi32>
    %3 = tpu.iota {dimensions = array<i32: 1>} : vector<24x48xi32>
    %4 = vector.extract_strided_slice %2 {offsets = [0, 0], sizes = [24, 1], strides = [1, 1]} : vector<24x4xi32> to vector<24x1xi32>
    %5 = vector.broadcast %4 : vector<24x1xi32> to vector<24x48xi32>
    %6 = arith.cmpi eq, %3, %5 : vector<24x48xi32>
    %7 = vector.extract_strided_slice %2 {offsets = [0, 1], sizes = [24, 1], strides = [1, 1]} : vector<24x4xi32> to vector<24x1xi32>
    %8 = vector.broadcast %7 : vector<24x1xi32> to vector<24x48xi32>
    %9 = arith.cmpi eq, %3, %8 : vector<24x48xi32>
    %10 = arith.ori %6, %9 : vector<24x48xi1>
    %11 = vector.extract_strided_slice %2 {offsets = [0, 2], sizes = [24, 1], strides = [1, 1]} : vector<24x4xi32> to vector<24x1xi32>
    %12 = vector.broadcast %11 : vector<24x1xi32> to vector<24x48xi32>
    %13 = arith.cmpi eq, %3, %12 : vector<24x48xi32>
    %14 = arith.ori %10, %13 : vector<24x48xi1>
    %15 = vector.extract_strided_slice %2 {offsets = [0, 3], sizes = [24, 1], strides = [1, 1]} : vector<24x4xi32> to vector<24x1xi32>
    %16 = vector.broadcast %15 : vector<24x1xi32> to vector<24x48xi32>
    %17 = arith.cmpi eq, %3, %16 : vector<24x48xi32>
    %18 = arith.ori %14, %17 : vector<24x48xi1>
    %19 = arith.extui %18 : vector<24x48xi1> to vector<24x48xi32>
    %20 = arith.sitofp %19 : vector<24x48xi32> to vector<24x48xf32>
    %c0_1 = arith.constant 0 : index
    %c0_2 = arith.constant 0 : index
    %21 = vector.load %arg5[%c0_1, %c0_2] : memref<24x48xf32, #tpu.memory_space<vmem>>, vector<24x48xf32>
    tpu.vector_store %arg5[%c0_1, %c0_2], %20 {strides = array<i32>} : memref<24x48xf32, #tpu.memory_space<vmem>>, vector<24x48xf32>,
    %c1 = arith.constant 1 : index
    %c0_3 = arith.constant 0 : index
    %22 = vector.load %arg3[%c1, %c0_3] : memref<8x128xf32, #tpu.memory_space<vmem>>, vector<1x4xf32>
    %c2 = arith.constant 2 : index
    %c0_4 = arith.constant 0 : index
    %23 = vector.load %arg3[%c2, %c0_4] : memref<8x128xf32, #tpu.memory_space<vmem>>, vector<1x4xf32>
    %24 = vector.extract_strided_slice %0 {offsets = [0, 0], sizes = [24, 4], strides = [1, 1]} : vector<24x8xf32> to vector<24x4xf32>
    %25 = vector.broadcast %22 : vector<1x4xf32> to vector<24x4xf32>
    %26 = arith.mulf %24, %25 : vector<24x4xf32>
    %27 = vector.broadcast %23 : vector<1x4xf32> to vector<24x4xf32>
    %28 = arith.addf %26, %27 : vector<24x4xf32>
    %cst = arith.constant 0.000000e+00 : f32
    %29 = vector.broadcast %cst : f32 to vector<24x4xf32>
    %30 = arith.subf %29, %28 : vector<24x4xf32>
    %31 = math.exp %30 : vector<24x4xf32>
    %cst_5 = arith.constant 1.000000e+00 : f32
    %32 = vector.broadcast %cst_5 : f32 to vector<24x4xf32>
    %33 = arith.addf %32, %31 : vector<24x4xf32>
    %34 = tpu.reciprocal %33 : vector<24x4xf32> -> vector<24x4xf32>
    %35 = arith.mulf %28, %34 : vector<24x4xf32>
    %36 = vector.extract_strided_slice %35 {offsets = [0, 0], sizes = [24, 2], strides = [1, 1]} : vector<24x4xf32> to vector<24x2xf32>
    %c0_6 = arith.constant 0 : index
    %c16 = arith.constant 16 : index
    %37 = vector.load %arg5[%c0_6, %c16] : memref<24x48xf32, #tpu.memory_space<vmem>>, vector<24x2xf32>
    tpu.vector_store %arg5[%c0_6, %c16], %36 {strides = array<i32>} : memref<24x48xf32, #tpu.memory_space<vmem>>, vector<24x2xf32>,
    %38 = vector.extract_strided_slice %35 {offsets = [0, 2], sizes = [24, 2], strides = [1, 1]} : vector<24x4xf32> to vector<24x2xf32>
    %c0_7 = arith.constant 0 : index
    %c40 = arith.constant 40 : index
    %39 = vector.load %arg5[%c0_7, %c40] : memref<24x48xf32, #tpu.memory_space<vmem>>, vector<24x2xf32>
    tpu.vector_store %arg5[%c0_7, %c40], %38 {strides = array<i32>} : memref<24x48xf32, #tpu.memory_space<vmem>>, vector<24x2xf32>,
    %c0_8 = arith.constant 0 : index
    %c0_9 = arith.constant 0 : index
    %40 = vector.load %arg5[%c0_8, %c0_9] : memref<24x48xf32, #tpu.memory_space<vmem>>, vector<24x48xf32>
    %c0_10 = arith.constant 0 : index
    %c0_11 = arith.constant 0 : index
    %41 = vector.load %arg2[%c0_10, %c0_11] : memref<48x128xf32, #tpu.memory_space<vmem>>, vector<48x128xf32>
    %cst_12 = arith.constant dense<0.000000e+00> : vector<24x128xf32>
    %42 = tpu.matmul %40, %41, %cst_12 {dimension_numbers = #tpu.dot_dimension_numbers<[1], [0], [0], [1], [0, 0, 1, 1], [], []>} : vector<24x48xf32>, vector<48x128xf32>, vector<24x128xf32> -> vector<24x128xf32>
    %c0_13 = arith.constant 0 : index
    %c0_14 = arith.constant 0 : index
    %43 = vector.load %arg3[%c0_13, %c0_14] : memref<8x128xf32, #tpu.memory_space<vmem>>, vector<1x128xf32>
    %44 = vector.broadcast %43 : vector<1x128xf32> to vector<24x128xf32>
    %45 = arith.addf %42, %44 : vector<24x128xf32>
    %cst_15 = arith.constant 0.000000e+00 : f32
    %46 = vector.broadcast %cst_15 : f32 to vector<24x128xf32>
    %47 = arith.subf %46, %45 : vector<24x128xf32>
    %48 = math.exp %47 : vector<24x128xf32>
    %cst_16 = arith.constant 1.000000e+00 : f32
    %49 = vector.broadcast %cst_16 : f32 to vector<24x128xf32>
    %50 = arith.addf %49, %48 : vector<24x128xf32>
    %51 = tpu.reciprocal %50 : vector<24x128xf32> -> vector<24x128xf32>
    %52 = arith.mulf %45, %51 : vector<24x128xf32>
    %c0_17 = arith.constant 0 : index
    %c0_18 = arith.constant 0 : index
    %53 = vector.load %arg4[%c0_17, %c0_18] : memref<24x128xf32, #tpu.memory_space<vmem>>, vector<24x128xf32>
    tpu.vector_store %arg4[%c0_17, %c0_18], %52 {strides = array<i32>} : memref<24x128xf32, #tpu.memory_space<vmem>>, vector<24x128xf32>,
    return
  }
  func.func @transform_0(%arg0: i32) -> (i32, i32) {
    %c0_i32 = arith.constant 0 : i32
    %c0_i32_0 = arith.constant 0 : i32
    return %arg0, %c0_i32 : i32, i32
  }
  func.func @transform_1(%arg0: i32) -> (i32, i32) {
    %c0_i32 = arith.constant 0 : i32
    %c0_i32_0 = arith.constant 0 : i32
    %c0_i32_1 = arith.constant 0 : i32
    return %c0_i32, %c0_i32_0 : i32, i32
  }
  func.func @transform_2(%arg0: i32) -> (i32, i32) {
    %c0_i32 = arith.constant 0 : i32
    %c0_i32_0 = arith.constant 0 : i32
    %c0_i32_1 = arith.constant 0 : i32
    return %c0_i32, %c0_i32_0 : i32, i32
  }
  func.func @transform_3(%arg0: i32) -> (i32, i32) {
    %c0_i32 = arith.constant 0 : i32
    %c0_i32_0 = arith.constant 0 : i32
    return %arg0, %c0_i32 : i32, i32
  }
}

</mosaic_0001>

<llo_original>
// kernel: node_feature_embedding.1
$region0: #{node_feature_embedding.1}
  #allocation0 [shape = 'u32[]', space=smem, size = 0x4, offset = 0x4, fixed_abs, tag = 'smem constant byte address 0x4 - core index']
  #allocation1 [shape = 'u32[72,128]{1,0:T(1,128)}', space=vmem, size = 0x9000, scoped, tag = 'internal scratch']
  #allocation2 [shape = 'f32[24,48]{1,0:T(8,128)}', space=vmem, size = 0x3000, scoped, tag = 'scratch operand']
  %s0 = inlined_call_operand.vmem [shape: f32[19,8], index: 0, kind: input, shape index: {}]
  %s1 = inlined_call_operand.vmem [shape: f32[48,128], index: 1, kind: input, shape index: {}]
  %s2 = inlined_call_operand.vmem [shape: f32[8,128], index: 2, kind: input, shape index: {}]
  %s3 = inlined_call_operand.vmem [shape: f32[19,128], index: 3, kind: output, shape index: {}]
  %s4 = sld [smem:[#allocation0]]
  $region22: #{node_feature_embedding.1} parent=0
    _
  %s6 = ssub.s32 1, %s4
  %s7 = scalar_select 0, %s6, %s4
  // Predicated region
  $region2: #{node_feature_embedding.1} parent=0 // pred_check
    _
  $region3: #{node_feature_embedding.1} parent=0 // pred_check_branch
    %9 = sbr.rel (0) target = $region5
  $region4: #{node_feature_embedding.1} parent=0 // pred_region
    _
  $region5: #{node_feature_embedding.1} parent=0 // pred_fallthru
    _
  // Predicated region
  $region6: #{node_feature_embedding.1} parent=0 // pred_check
    _
  $region7: #{node_feature_embedding.1} parent=0 // pred_check_branch
    %11 = sbr.rel (0) target = $region9
  $region8: #{node_feature_embedding.1} parent=0 // pred_region
    _
  $region9: #{node_feature_embedding.1} parent=0 // pred_fallthru
    _
  // Predicated region
  $region10: #{node_feature_embedding.1} parent=0 // pred_check
    _
  $region11: #{node_feature_embedding.1} parent=0 // pred_check_branch
    %13 = sbr.rel (0) target = $region13
  $region12: #{node_feature_embedding.1} parent=0 // pred_region
    _
  $region13: #{node_feature_embedding.1} parent=0 // pred_fallthru
    _
  %v14 = vld [vmem:[%s0] sm:$0xff]
  %v15 = vld [vmem:[%s0 + $0x8] sm:$0xff]
  %v16 = vld [vmem:[%s0 + $0x10] sm:$0xff]
  %v20 = vlaneseq
  %v21 = vand.u32 %v20, 127
  %22 = vset.pattern.permute.xlu0 4
  %23 = vperm.xlu0 %22, %v14
  %v24 = vpop.permute.xlu0 %23
  %25 = vset.pattern.permute.xlu0 4
  %26 = vperm.xlu0 %25, %v15
  %v27 = vpop.permute.xlu0 %26
  %28 = vset.pattern.permute.xlu0 4
  %29 = vperm.xlu0 %28, %v16
  %v30 = vpop.permute.xlu0 %29
  %vm31 = vcmp.eq.s32.totalorder %v21, %v24
  %vm32 = vcmp.eq.s32.totalorder %v21, %v27
  %vm33 = vcmp.eq.s32.totalorder %v21, %v30
  %34 = vset.pattern.permute.xlu0 5
  %35 = vperm.xlu0 %34, %v14
  %v36 = vpop.permute.xlu0 %35
  %37 = vset.pattern.permute.xlu0 5
  %38 = vperm.xlu0 %37, %v15
  %v39 = vpop.permute.xlu0 %38
  %40 = vset.pattern.permute.xlu0 5
  %41 = vperm.xlu0 %40, %v16
  %v42 = vpop.permute.xlu0 %41
  %vm43 = vcmp.eq.s32.totalorder %v21, %v36
  %vm44 = vcmp.eq.s32.totalorder %v21, %v39
  %vm45 = vcmp.eq.s32.totalorder %v21, %v42
  %vm46 = vmor %vm31, %vm43
  %vm47 = vmor %vm32, %vm44
  %vm48 = vmor %vm33, %vm45
  %49 = vset.pattern.permute.xlu0 6
  %50 = vperm.xlu0 %49, %v14
  %v51 = vpop.permute.xlu0 %50
  %52 = vset.pattern.permute.xlu0 6
  %53 = vperm.xlu0 %52, %v15
  %v54 = vpop.permute.xlu0 %53
  %55 = vset.pattern.permute.xlu0 6
  %56 = vperm.xlu0 %55, %v16
  %v57 = vpop.permute.xlu0 %56
  %vm58 = vcmp.eq.s32.totalorder %v21, %v51
  %vm59 = vcmp.eq.s32.totalorder %v21, %v54
  %vm60 = vcmp.eq.s32.totalorder %v21, %v57
  %vm61 = vmor %vm46, %vm58
  %vm62 = vmor %vm47, %vm59
  %vm63 = vmor %vm48, %vm60
  %64 = vset.pattern.permute.xlu0 7
  %65 = vperm.xlu0 %64, %v14
  %v66 = vpop.permute.xlu0 %65
  %67 = vset.pattern.permute.xlu0 7
  %68 = vperm.xlu0 %67, %v15
  %v69 = vpop.permute.xlu0 %68
  %70 = vset.pattern.permute.xlu0 7
  %71 = vperm.xlu0 %70, %v16
  %v72 = vpop.permute.xlu0 %71
  %vm73 = vcmp.eq.s32.totalorder %v21, %v66
  %vm74 = vcmp.eq.s32.totalorder %v21, %v69
  %vm75 = vcmp.eq.s32.totalorder %v21, %v72
  %vm76 = vmor %vm61, %vm73
  %vm77 = vmor %vm62, %vm74
  %vm78 = vmor %vm63, %vm75
  %v79 = vsel %vm76, 1, 0
  %v80 = vsel %vm77, 1, 0
  %v81 = vsel %vm78, 1, 0
  %v82 = vcvt.s32.f32 %v79
  %v83 = vcvt.s32.f32 %v80
  %v84 = vcvt.s32.f32 %v81
  %vm85 = vcmask 392192
  %86 = vst.msk [vmem:[#allocation2] sm:$0xff] %vm85, %v82
  %87 = vst.msk [vmem:[#allocation2 + $0x8] sm:$0xff] %vm85, %v83
  %88 = vst.msk [vmem:[#allocation2 + $0x10] sm:$0xff] %vm85, %v84
  %v89 = vld [vmem:[%s2 + $0x1] sm:$0x1]
  %v90 = vld [vmem:[%s2 + $0x2] sm:$0x1]
  %v91 = vperm.slane %v89, 0
  %v92 = vmul.f32 %v14, %v91
  %v93 = vmul.f32 %v15, %v91
  %v94 = vmul.f32 %v16, %v91
  %v95 = vperm.slane %v90, 0
  %v96 = vadd.f32 %v92, %v95
  %v97 = vadd.f32 %v93, %v95
  %v98 = vadd.f32 %v94, %v95
  %v99 = vsub.f32 0.0, %v96
  %v100 = vsub.f32 0.0, %v97
  %v101 = vsub.f32 0.0, %v98
  %v102 = vmul.f32 %v99, 1.442695
  %v103 = vpow.pop %v102
  %v104 = vmul.f32 %v100, 1.442695
  %v105 = vpow.pop %v104
  %v106 = vmul.f32 %v101, 1.442695
  %v107 = vpow.pop %v106
  %v108 = vadd.f32 %v103, 1.0
  %v109 = vadd.f32 %v105, 1.0
  %v110 = vadd.f32 %v107, 1.0
  %v111 = vrcp.pop %v108
  %v112 = vmul.f32 %v108, %v111
  %v113 = vsub.f32 1.0, %v112
  %v114 = vmul.f32 %v111, %v113
  %v115 = vadd.f32 %v111, %v114
  %vm116 = vweird.f32 %v108
  %vm117 = vweird.f32 %v111
  %vm118 = vmor %vm116, %vm117
  %v119 = vsel %vm118, %v111, %v115
  %v120 = vand.u32 2147483647, %v108
  %vm121 = vcmp.eq.f32.partialorder %v120, 8.507059e+37
  %v122 = vand.u32 %v108, 2147483648
  %v123 = vor.u32 1.1754944e-38, %v122
  %v124 = vsel %vm121, %v123, %v119
  %v125 = vrcp.pop %v109
  %v126 = vmul.f32 %v109, %v125
  %v127 = vsub.f32 1.0, %v126
  %v128 = vmul.f32 %v125, %v127
  %v129 = vadd.f32 %v125, %v128
  %vm130 = vweird.f32 %v109
  %vm131 = vweird.f32 %v125
  %vm132 = vmor %vm130, %vm131
  %v133 = vsel %vm132, %v125, %v129
  %v134 = vand.u32 2147483647, %v109
  %vm135 = vcmp.eq.f32.partialorder %v134, 8.507059e+37
  %v136 = vand.u32 %v109, 2147483648
  %v137 = vor.u32 1.1754944e-38, %v136
  %v138 = vsel %vm135, %v137, %v133
  %v139 = vrcp.pop %v110
  %v140 = vmul.f32 %v110, %v139
  %v141 = vsub.f32 1.0, %v140
  %v142 = vmul.f32 %v139, %v141
  %v143 = vadd.f32 %v139, %v142
  %vm144 = vweird.f32 %v110
  %vm145 = vweird.f32 %v139
  %vm146 = vmor %vm144, %vm145
  %v147 = vsel %vm146, %v139, %v143
  %v148 = vand.u32 2147483647, %v110
  %vm149 = vcmp.eq.f32.partialorder %v148, 8.507059e+37
  %v150 = vand.u32 %v110, 2147483648
  %v151 = vor.u32 1.1754944e-38, %v150
  %v152 = vsel %vm149, %v151, %v147
  %v153 = vmul.f32 %v96, %v124
  %v154 = vmul.f32 %v97, %v138
  %v155 = vmul.f32 %v98, %v152
  %159 = vrot.lane.b32.xlu0 %v153, 16
  %v160 = vpop.permute.xlu0 %159
  %161 = vrot.lane.b32.xlu0 %v154, 16
  %v162 = vpop.permute.xlu0 %161
  %163 = vrot.lane.b32.xlu0 %v155, 16
  %v164 = vpop.permute.xlu0 %163
  %vm168 = vcmask 146560
  %169 = vst.msk [vmem:[#allocation2] sm:$0xff] %vm168, %v160
  %170 = vst.msk [vmem:[#allocation2 + $0x8] sm:$0xff] %vm168, %v162
  %171 = vst.msk [vmem:[#allocation2 + $0x10] sm:$0xff] %vm168, %v164
  %172 = vrot.lane.b32.xlu0 %v153, 38
  %v173 = vpop.permute.xlu0 %172
  %174 = vrot.lane.b32.xlu0 %v154, 38
  %v175 = vpop.permute.xlu0 %174
  %176 = vrot.lane.b32.xlu0 %v155, 38
  %v177 = vpop.permute.xlu0 %176
  %vm181 = vcmask 343360
  %182 = vst.msk [vmem:[#allocation2] sm:$0xff] %vm181, %v173
  %183 = vst.msk [vmem:[#allocation2 + $0x8] sm:$0xff] %vm181, %v175
  %184 = vst.msk [vmem:[#allocation2 + $0x10] sm:$0xff] %vm181, %v177
  %v185 = vld [vmem:[#allocation2] sm:$0xff]
  %v186 = vld [vmem:[#allocation2 + $0x8] sm:$0xff]
  %v187 = vld [vmem:[#allocation2 + $0x10] sm:$0xff]
  %v188 = vld [vmem:[%s1] sm:$0xff]
  %v189 = vld [vmem:[%s1 + $0x8] sm:$0xff]
  %v190 = vld [vmem:[%s1 + $0x10] sm:$0xff]
  %v191 = vld [vmem:[%s1 + $0x18] sm:$0xff]
  %v192 = vld [vmem:[%s1 + $0x20] sm:$0xff]
  %v193 = vld [vmem:[%s1 + $0x28] sm:$0xff]
  %v194 = vld [vmem:[%s2] sm:$0x1]
  %v195 = vperm.slane %v194, 0
  %v197 = vsel %vm85, %v185, 0
  %v200 = vsel %vm85, %v186, 0
  %v203 = vsel %vm85, %v187, 0
  %205 = vmatpush.msra.mxu0 0.0
  %206 = vmatpush.msra.mxu0 0.0
  %207 = vmatpush.msra.mxu0 0.0
  %208 = vmatpush.msra.mxu0 0.0
  %209 = vmatpush.msra.mxu0 0.0
  %210 = vmatpush.msra.mxu0 0.0
  %211 = vmatpush.msra.mxu0 0.0
  %212 = vmatpush.msra.mxu0 0.0
  %213 = vmatpush.msra.mxu0 0.0
  %214 = vmatpush.msra.mxu0 0.0
  %215 = vmatpush.msra.mxu0 %v193
  %216 = vmatpush.msra.mxu0 %v192
  %217 = vmatpush.msra.mxu0 %v191
  %218 = vmatpush.msra.mxu0 %v190
  %219 = vmatpush.msra.mxu0 %v189
  %220 = vmatpush.msra.mxu0 %v188
  %221 = vmatmul.f32.gmra.mxu0 %v197
  %v222 = vpop.f32.mrf.mxu0
  %v223 = vadd.f32 %v195, %v222
  %224 = vmatmul.f32.gmra.mxu0 %v200
  %v225 = vpop.f32.mrf.mxu0
  %v226 = vadd.f32 %v195, %v225
  %227 = vmatmul.f32.gmra.mxu0 %v203
  %v228 = vpop.f32.mrf.mxu0
  %v229 = vadd.f32 %v195, %v228
  %230 = vdwg.mxu0
  %v231 = vsub.f32 0.0, %v223
  %v232 = vsub.f32 0.0, %v226
  %v233 = vsub.f32 0.0, %v229
  %v234 = vmul.f32 %v231, 1.442695
  %v235 = vpow.pop %v234
  %v236 = vmul.f32 %v232, 1.442695
  %v237 = vpow.pop %v236
  %v238 = vmul.f32 %v233, 1.442695
  %v239 = vpow.pop %v238
  %v240 = vadd.f32 %v235, 1.0
  %v241 = vadd.f32 %v237, 1.0
  %v242 = vadd.f32 %v239, 1.0
  %v243 = vrcp.pop %v240
  %v244 = vmul.f32 %v240, %v243
  %v245 = vsub.f32 1.0, %v244
  %v246 = vmul.f32 %v243, %v245
  %v247 = vadd.f32 %v243, %v246
  %vm248 = vweird.f32 %v240
  %vm249 = vweird.f32 %v243
  %vm250 = vmor %vm248, %vm249
  %v251 = vsel %vm250, %v243, %v247
  %v252 = vand.u32 2147483647, %v240
  %vm253 = vcmp.eq.f32.partialorder %v252, 8.507059e+37
  %v254 = vand.u32 %v240, 2147483648
  %v255 = vor.u32 1.1754944e-38, %v254
  %v256 = vsel %vm253, %v255, %v251
  %v257 = vrcp.pop %v241
  %v258 = vmul.f32 %v241, %v257
  %v259 = vsub.f32 1.0, %v258
  %v260 = vmul.f32 %v257, %v259
  %v261 = vadd.f32 %v257, %v260
  %vm262 = vweird.f32 %v241
  %vm263 = vweird.f32 %v257
  %vm264 = vmor %vm262, %vm263
  %v265 = vsel %vm264, %v257, %v261
  %v266 = vand.u32 2147483647, %v241
  %vm267 = vcmp.eq.f32.partialorder %v266, 8.507059e+37
  %v268 = vand.u32 %v241, 2147483648
  %v269 = vor.u32 1.1754944e-38, %v268
  %v270 = vsel %vm267, %v269, %v265
  %v271 = vrcp.pop %v242
  %v272 = vmul.f32 %v242, %v271
  %v273 = vsub.f32 1.0, %v272
  %v274 = vmul.f32 %v271, %v273
  %v275 = vadd.f32 %v271, %v274
  %vm276 = vweird.f32 %v242
  %vm277 = vweird.f32 %v271
  %vm278 = vmor %vm276, %vm277
  %v279 = vsel %vm278, %v271, %v275
  %v280 = vand.u32 2147483647, %v242
  %vm281 = vcmp.eq.f32.partialorder %v280, 8.507059e+37
  %v282 = vand.u32 %v242, 2147483648
  %v283 = vor.u32 1.1754944e-38, %v282
  %v284 = vsel %vm281, %v283, %v279
  %v285 = vmul.f32 %v223, %v256
  %v286 = vmul.f32 %v226, %v270
  %v287 = vmul.f32 %v229, %v284
  %288 = vst [vmem:[%s3] sm:$0xff] %v285
  %289 = vst [vmem:[%s3 + $0x8] sm:$0xff] %v286
  %290 = vst [vmem:[%s3 + $0x10] sm:$0xff] %v287
  // Predicated region
  $region14: #{node_feature_embedding.1} parent=0 // pred_check
    _
  $region15: #{node_feature_embedding.1} parent=0 // pred_check_branch
    %292 = sbr.rel (0) target = $region17
  $region16: #{node_feature_embedding.1} parent=0 // pred_region
    _
  $region17: #{node_feature_embedding.1} parent=0 // pred_fallthru
    _
  // Predicated region
  $region18: #{node_feature_embedding.1} parent=0 // pred_check
    _
  $region19: #{node_feature_embedding.1} parent=0 // pred_check_branch
    %294 = sbr.rel (0) target = $region21
  $region20: #{node_feature_embedding.1} parent=0 // pred_region
    _
  $region21: #{node_feature_embedding.1} parent=0 // pred_fallthru
    _

</llo_original>
